<compile_context>
chip_gen: v6e
topology: v6e:2x2x1
jax: 0.10.0
libtpu: 0.0.40
codegen_flags: <defaults>
</compile_context>

<pallas_src>
import jax
import jax.numpy as jnp
from jax.experimental import pallas as pl
from jax.experimental.pallas import tpu as pltpu


def _cdiv(a, b):
    return (a + b - 1) // b


def _round_up(x, m):
    return ((x + m - 1) // m) * m


def _value_head_kernel_vpu(h_ref, w_ref, b_ref, o_ref):
    # h_ref: (tb, D) f32 VMEM   w_ref: (1, D) f32 VMEM   b_ref: (1,) f32 SMEM
    # o_ref: (tb, 1) VMEM
    prod = h_ref[...] * w_ref[...]                       # VPU, sublane-broadcast of w
    acc = jnp.sum(prod, axis=1, keepdims=True)           # (tb, 1) lane-axis reduce (XLU)
    o_ref[...] = (acc + b_ref[0]).astype(o_ref.dtype)


def _value_head_kernel_mxu(h_ref, w_ref, b_ref, o_ref):
    # h_ref: (tb, D) VMEM   w_ref: (D, 1) VMEM   b_ref: (1,) f32 SMEM
    # o_ref: (tb, 1) VMEM
    acc = jnp.dot(h_ref[...], w_ref[...],
                  preferred_element_type=jnp.float32)    # MXU, reduction in-array
    o_ref[...] = (acc + b_ref[0]).astype(o_ref.dtype)


def _vmem_capacity_bytes():
    try:
        return int(pltpu.get_tpu_info().vmem_capacity_bytes)
    except Exception:
        return 64 << 20                                  # conservative: v7x per-TC VMEM


def _pick_batch_tile(n_rows, d, itemsize, budget_bytes):
    """Largest batch tile whose double-buffered h stream fits `budget_bytes`,
    rounded to lane/sublane-friendly sizes, with >= 2 grid steps on big batches
    so both v7x TensorCores get a share of the parallel axis."""
    sublane = max(8, 32 // itemsize)                     # 8 (f32), 16 (bf16), 32 (int8)
    fit = max(sublane, budget_bytes // (2 * d * itemsize))
    if fit >= 128:
        fit = (fit // 128) * 128
    else:
        fit = max(sublane, (fit // sublane) * sublane)
    if n_rows >= 2 * 128:
        fit = min(fit, _round_up(_cdiv(n_rows, 2), 128))  # guarantee >= 2 grid steps
    if n_rows <= fit:
        return _round_up(n_rows, sublane)                 # single (possibly partial) tile
    return fit


def value_head_forward(h, w, b):
    """Pallas equivalent of `nn.Linear(D, 1)(h).squeeze(-1)`.

    h: (..., D) activations.
    w: (1, D)   weight (PyTorch nn.Linear layout).
    b: (1,)     bias.
    Returns an array of shape h.shape[:-1] in h.dtype.
    """
    *lead, D = h.shape
    assert w.shape == (1, D), w.shape
    assert b.shape == (1,), b.shape

    n = 1
    for s in lead:
        n *= s
    h2 = h.reshape(n, D)
    b32 = b.astype(jnp.float32)

    itemsize = jnp.dtype(h.dtype).itemsize
    vmem_cap = _vmem_capacity_bytes()
    budget = min(48 << 20, (vmem_cap * 2) // 5)          # ~40% of VMEM, capped at 48 MiB
    tb = _pick_batch_tile(n, D, itemsize, budget)
    nb = _cdiv(n, tb)

    # f32 stays on the VPU (exact f32 multiply-add); sub-32-bit dtypes use the
    # MXU natively (v5e's VPU has no bf16, and the MXU reduces inside the array).
    use_mxu = h.dtype != jnp.float32
    if use_mxu:
        kernel = _value_head_kernel_mxu
        w_in = w.reshape(D, 1).astype(h.dtype)           # (D, 1) column for the MXU
        w_spec = pl.BlockSpec((D, 1), lambda i: (0, 0))  # resident across grid steps
    else:
        kernel = _value_head_kernel_vpu
        w_in = w.astype(jnp.float32)                     # (1, D) row for the VPU
        w_spec = pl.BlockSpec((1, D), lambda i: (0, 0))  # resident across grid steps

    cost = pl.CostEstimate(
        flops=2 * n * D,
        transcendentals=0,
        bytes_accessed=n * D * itemsize + D * itemsize + n * itemsize,
    )
    vmem_limit = int(min(budget + (8 << 20), vmem_cap - (4 << 20)))

    out = pl.pallas_call(
        kernel,
        out_shape=jax.ShapeDtypeStruct((n, 1), h.dtype),
        grid=(nb,),
        in_specs=[
            pl.BlockSpec((tb, D), lambda i: (i, 0)),             # streamed h tile
            w_spec,                                              # resident weight
            pl.BlockSpec(memory_space=pltpu.MemorySpace.SMEM),   # bias scalar
        ],
        out_specs=pl.BlockSpec((tb, 1), lambda i: (i, 0)),       # (tb, 1) column block
        compiler_params=pltpu.CompilerParams(
            dimension_semantics=("parallel",),                   # megacore-shardable
            vmem_limit_bytes=vmem_limit,
        ),
        cost_estimate=cost,
    )(h2, w_in, b32)

    return out.reshape(tuple(lead))


if __name__ == "__main__":
    INPUT_DIM = 256   # module default
    key = jax.random.PRNGKey(0)
    k_h, k_w, k_b = jax.random.split(key, 3)

    # Deterministic synthetic params mimicking nn.Linear's U(-1/sqrt(D), 1/sqrt(D)) init.
    bound = 1.0 / (INPUT_DIM ** 0.5)
    w = jax.random.uniform(k_w, (1, INPUT_DIM), dtype=jnp.float32, minval=-bound, maxval=bound)
    b = jax.random.uniform(k_b, (1,), dtype=jnp.float32, minval=-bound, maxval=bound)

    # (8,): aligned; (10,): ragged last block; (2, 5): multi-dim lead;
    # (300,): multi-step grid (>=2 parallel steps) with an uneven last block.
    for shape in ((8,), (10,), (2, 5), (300,)):
        h = jax.random.normal(k_h, shape + (INPUT_DIM,), dtype=jnp.float32)
        out = jax.block_until_ready(value_head_forward(h, w, b))
        ref = h.reshape(-1, INPUT_DIM) @ w[0] + b[0]
        assert out.shape == shape, (out.shape, shape)
        assert jnp.allclose(out.reshape(-1), ref, atol=1e-5, rtol=1e-5)

    # bf16 activations exercise the MXU path (native bf16, f32 accumulation).
    h16 = jax.random.normal(k_h, (10, INPUT_DIM), dtype=jnp.bfloat16)
    w16 = w.astype(jnp.bfloat16)
    out16 = jax.block_until_ready(value_head_forward(h16, w16, b))
    ref16 = h16.astype(jnp.float32) @ w16.astype(jnp.float32)[0] + b[0]
    assert out16.shape == (10,), out16.shape
    assert jnp.allclose(out16.astype(jnp.float32), ref16, atol=5e-2, rtol=5e-2)

    print("KERNEL_OK")
</pallas_src>

<mosaic_0001>
module attributes {stable_mosaic.version = 11 : i64} {
  func.func @_value_head_kernel_vpu(%arg0: i32, %arg1: memref<8x256xf32, #tpu.memory_space<vmem>>, %arg2: memref<1x256xf32, #tpu.memory_space<vmem>>, %arg3: memref<1xf32, #tpu.memory_space<smem>>, %arg4: memref<8x1xf32, #tpu.memory_space<vmem>>) attributes {dimension_semantics = [#tpu.dimension_semantics<parallel>], iteration_bounds = array<i64: 1>, scalar_prefetch = 0 : i64, scratch_operands = 0 : i64, tpu.core_type = #tpu.core_type<tc>, window_params = [{transform_indices = @transform_0, window_bounds = array<i64: 8, 256>}, {pipeline_mode = #tpu.pipeline_mode<synchronous>, transform_indices = @transform_1, window_bounds = array<i64: 1, 256>}, {transform_indices = @transform_2, window_bounds = array<i64: 1>}, {transform_indices = @transform_3, window_bounds = array<i64: 8, 1>}]} {
    %c0 = arith.constant 0 : index
    %c0_0 = arith.constant 0 : index
    %0 = vector.load %arg1[%c0, %c0_0] : memref<8x256xf32, #tpu.memory_space<vmem>>, vector<8x256xf32>
    %c0_1 = arith.constant 0 : index
    %c0_2 = arith.constant 0 : index
    %1 = vector.load %arg2[%c0_1, %c0_2] : memref<1x256xf32, #tpu.memory_space<vmem>>, vector<1x256xf32>
    %2 = vector.broadcast %1 : vector<1x256xf32> to vector<8x256xf32>
    %3 = arith.mulf %0, %2 : vector<8x256xf32>
    %cst = arith.constant dense<0.000000e+00> : vector<8xf32>
    %4 = vector.multi_reduction <add>, %3, %cst [1] : vector<8x256xf32> to vector<8xf32>
    %5 = vector.shape_cast %4 : vector<8xf32> to vector<8x1xf32>
    %c0_3 = arith.constant 0 : index
    %6 = memref.load %arg3[%c0_3] : memref<1xf32, #tpu.memory_space<smem>>
    %7 = vector.broadcast %6 : f32 to vector<8x1xf32>
    %8 = arith.addf %5, %7 : vector<8x1xf32>
    %c0_4 = arith.constant 0 : index
    %c0_5 = arith.constant 0 : index
    %9 = vector.load %arg4[%c0_4, %c0_5] : memref<8x1xf32, #tpu.memory_space<vmem>>, vector<8x1xf32>
    tpu.vector_store %arg4[%c0_4, %c0_5], %8 {strides = array<i32>} : memref<8x1xf32, #tpu.memory_space<vmem>>, vector<8x1xf32>,
    return
  }
  func.func @transform_0(%arg0: i32) -> (i32, i32) {
    %c0_i32 = arith.constant 0 : i32
    %c0_i32_0 = arith.constant 0 : i32
    return %arg0, %c0_i32 : i32, i32
  }
  func.func @transform_1(%arg0: i32) -> (i32, i32) {
    %c0_i32 = arith.constant 0 : i32
    %c0_i32_0 = arith.constant 0 : i32
    %c0_i32_1 = arith.constant 0 : i32
    return %c0_i32, %c0_i32_0 : i32, i32
  }
  func.func @transform_2(%arg0: i32) -> i32 {
    %c0_i32 = arith.constant 0 : i32
    %c0_i32_0 = arith.constant 0 : i32
    return %c0_i32 : i32
  }
  func.func @transform_3(%arg0: i32) -> (i32, i32) {
    %c0_i32 = arith.constant 0 : i32
    %c0_i32_0 = arith.constant 0 : i32
    return %arg0, %c0_i32 : i32, i32
  }
}

</mosaic_0001>

<llo_original>
// kernel: tpu_custom_call.1
$region0: #{tpu_custom_call.1}
  #allocation0 [shape = 'u32[]', space=smem, size = 0x4, offset = 0x4, fixed_abs, tag = 'smem constant byte address 0x4 - core index']
  #allocation1 [shape = 'u32[144,128]{1,0:T(1,128)}', space=vmem, size = 0x12000, scoped, tag = 'internal scratch']
  #allocation2 [shape = 'f32[1]{0:T(128)S(6)}', space=smem, size = 0x200, scoped, tag = 'scoped memory for tpu_custom_call.1']
  %s0 = inlined_call_operand.hbm [shape: f32[8,256], index: 0, kind: input, shape index: {}]
  %s1 = inlined_call_operand.vmem [shape: f32[1,256], index: 1, kind: input, shape index: {}]
  %s2 = inlined_call_operand.<no memory space> [shape: f32[1], index: 2, kind: input, shape index: {}]
  %s3 = inlined_call_operand.vmem [shape: f32[8,1], index: 3, kind: output, shape index: {}]
  %s4 = sld [smem:[#allocation0]]
  $region26: #{tpu_custom_call.1} parent=0
    _
  %s6 = ssub.s32 1, %s4
  %s7 = scalar_select 0, %s6, %s4
  %8 = sst [smem:[#allocation2]] %s2
  $region1: #{tpu_custom_call.1} parent=0
    #allocation3 [shape = 'u8[8192]{0}', space=vmem, size = 0x2000, scoped, tag = 'input window, operand 0, single buffered']
    #allocation4 [shape = 's32[1]{0}', space=sflag, size = 0x4, scoped, tag = 'scoped memory for tpu_custom_call.1']
    %9 = vsyncpa [#allocation4], 0
    // Predicated region
    $region2: #{tpu_custom_call.1} parent=1 // pred_check
      _
    $region3: #{tpu_custom_call.1} parent=1 // pred_check_branch
      %11 = sbr.rel (0) target = $region5
    $region4: #{tpu_custom_call.1} parent=1 // pred_region
      %s13 = ssub.s32 256, 256
      %14 = vsyncadd [#allocation4], %s13
      %s16 = sshll.u32 [#allocation3], 4
      %s17 = int_to_ptr.vmem [resolvable:$true] %s16
      %19 = dma.hbm_to_vmem [thread:$0]  %s0, 256, %s17, [#allocation4]
    $region5: #{tpu_custom_call.1} parent=1 // pred_fallthru
      _
    // Predicated region
    $region6: #{tpu_custom_call.1} parent=1 // pred_check
      _
    $region7: #{tpu_custom_call.1} parent=1 // pred_check_branch
      %21 = sbr.rel (0) target = $region9
    $region8: #{tpu_custom_call.1} parent=1 // pred_region
      _
    $region9: #{tpu_custom_call.1} parent=1 // pred_fallthru
      _
    // Predicated region
    $region10: #{tpu_custom_call.1} parent=1 // pred_check
      _
    $region11: #{tpu_custom_call.1} parent=1 // pred_check_branch
      %23 = sbr.rel (0) target = $region13
    $region12: #{tpu_custom_call.1} parent=1 // pred_region
      _
    $region13: #{tpu_custom_call.1} parent=1 // pred_fallthru
      _
    // Predicated region
    $region14: #{tpu_custom_call.1} parent=1 // pred_check
      _
    $region15: #{tpu_custom_call.1} parent=1 // pred_check_branch
      %25 = sbr.rel (0) target = $region17
    $region16: #{tpu_custom_call.1} parent=1 // pred_region
      %26 = dma.done [#allocation4], 256
    $region17: #{tpu_custom_call.1} parent=1 // pred_fallthru
      _
    %v27 = vld [vmem:[#allocation3] sm:$0xff]
    %v28 = vld [vmem:[#allocation3 + $0x8] sm:$0xff]
    %v29 = vld [vmem:[%s1] sm:$0x3]
    %v31 = vlaneseq
    %v32 = vshrl.u32 %v31, 7
    %v33 = vsub.s32 0, %v32
    %v34 = vrot.slane %v29, %v33
    %v35 = vlaneseq
    %v36 = vshrl.u32 %v35, 7
    %v37 = vsub.s32 1, %v36
    %v38 = vrot.slane %v29, %v37
    %v41 = vmul.f32 %v27, %v34
    %v42 = vmul.f32 %v28, %v38
    %v43 = vadd.f32 %v41, %v42
    %44 = vadd.xlane.f32.xlu0 %v43
    %v45 = vpop.xlane.xlu0 %44
    %s46 = sld [smem:[#allocation2]]
    %v47 = vstv %s46
    %v48 = vadd.f32 %v45, %v47
    %vm49 = vcmask 7168
    %50 = vst.msk [vmem:[%s3] sm:$0xff] %vm49, %v48
    // Predicated region
    $region18: #{tpu_custom_call.1} parent=1 // pred_check
      _
    $region19: #{tpu_custom_call.1} parent=1 // pred_check_branch
      %52 = sbr.rel (0) target = $region21
    $region20: #{tpu_custom_call.1} parent=1 // pred_region
      _
    $region21: #{tpu_custom_call.1} parent=1 // pred_fallthru
      _
    // Predicated region
    $region22: #{tpu_custom_call.1} parent=1 // pred_check
      _
    $region23: #{tpu_custom_call.1} parent=1 // pred_check_branch
      %54 = sbr.rel (0) target = $region25
    $region24: #{tpu_custom_call.1} parent=1 // pred_region
      _
    $region25: #{tpu_custom_call.1} parent=1 // pred_fallthru
      _
    %55 = vsyncpa [#allocation4], 1

</llo_original>
